<compile_context>
chip_gen: v7x
topology: tpu7x:2x2x1
jax: 0.10.0
libtpu: 0.0.40
codegen_flags: <defaults>
</compile_context>

<pallas_src>
import jax
import jax.numpy as jnp
from jax.experimental import pallas as pl
from jax.experimental.pallas import tpu as pltpu


def _decoder_kernel(ctx_ref, lat_ref, bbd_ref,
                    w1_ref, b1_ref, w2_ref, b2_ref, w3_ref, b3_ref,
                    out_ref):
    # Deterministic part on the MXU: (bt, A*F) @ (A*F, A) -> (bt, A)
    determ = jnp.dot(ctx_ref[...], bbd_ref[...],
                     preferred_element_type=jnp.float32)

    # Stochastic part: small MLP over latents (LeakyReLU, slope 0.01).
    h = jnp.dot(lat_ref[...], w1_ref[...],
                preferred_element_type=jnp.float32) + b1_ref[...]
    h = jnp.maximum(h, 0.01 * h)
    h = jnp.dot(h, w2_ref[...],
                preferred_element_type=jnp.float32) + b2_ref[...]
    h = jnp.maximum(h, 0.01 * h)
    random = jnp.dot(h, w3_ref[...],
                     preferred_element_type=jnp.float32) + b3_ref[...]

    out_ref[...] = (determ + random).astype(out_ref.dtype)


# Double-buffered streamed IO budget (ctx + latents + out blocks, each
# lane-padded to 128 lanes of f32).  40 MiB is safe on v7x's 64 MiB VMEM.
_VMEM_IO_BUDGET = 40 * 1024 * 1024
_PER_ROW_VMEM = 3 * 128 * 4          # 3 lane-padded f32 rows per batch row


def decoder_forward(context, latents, params, *, block_b=8192):
    """context: (B, A, F) f32, latents: (B, L) f32 -> util (B, A) f32."""
    B, A, F = context.shape
    L = latents.shape[1]
    H1 = params["w1"].shape[1]
    H2 = params["w2"].shape[1]

    # --- wrapper-side prep (cheap, one-time) --------------------------------
    ctx_flat = context.reshape(B, A * F)                       # lane-dense context
    # Block-diagonal beta weight: (A*F, A), block (a, a) == beta_w (F, 1).
    beta_bd = jnp.kron(jnp.eye(A, dtype=jnp.float32),
                       params["beta_w"].astype(jnp.float32))   # (A*F, A)
    # Fold the scalar beta bias into the last MLP bias (passed directly).
    b3_fused = (params["b3"] + params["beta_b"]).astype(jnp.float32)  # (1, A)

    # --- batch-tile selection (no padding; ragged last block is fine) -------
    bt_cap = max(8, (_VMEM_IO_BUDGET // (2 * _PER_ROW_VMEM)) // 8 * 8)
    if B <= 8:
        bt = B                                   # single full block (legal)
    else:
        # >=2 grid steps so both TensorCores get work on v7x megacore.
        half = pl.cdiv(pl.cdiv(B, 2), 8) * 8
        bt = max(8, (min(block_b, half, bt_cap) // 8) * 8)

    grid = (pl.cdiv(B, bt),)
    const = lambda i: (0, 0)                     # weights stay VMEM-resident

    weight_bytes = 4 * (beta_bd.size + params["w1"].size + params["b1"].size
                        + params["w2"].size + params["b2"].size
                        + params["w3"].size + b3_fused.size)
    cost = pl.CostEstimate(
        flops=2 * B * (A * F * A + L * H1 + H1 * H2 + H2 * A),
        transcendentals=0,
        bytes_accessed=4 * B * (A * F + L + A) + int(weight_bytes))

    vmem_limit = int(min(max(2 * _PER_ROW_VMEM * bt + (4 << 20), 16 << 20),
                         48 << 20))

    out = pl.pallas_call(
        _decoder_kernel,
        out_shape=jax.ShapeDtypeStruct((B, A), jnp.float32),
        grid=grid,
        in_specs=[
            pl.BlockSpec((bt, A * F), lambda i: (i, 0)),   # context (streamed)
            pl.BlockSpec((bt, L), lambda i: (i, 0)),       # latents (streamed)
            pl.BlockSpec((A * F, A), const),               # beta block-diag
            pl.BlockSpec((L, H1), const),                  # w1
            pl.BlockSpec((1, H1), const),                  # b1
            pl.BlockSpec((H1, H2), const),                 # w2
            pl.BlockSpec((1, H2), const),                  # b2
            pl.BlockSpec((H2, A), const),                  # w3
            pl.BlockSpec((1, A), const),                   # b3 + beta_b
        ],
        out_specs=pl.BlockSpec((bt, A), lambda i: (i, 0)),
        compiler_params=pltpu.CompilerParams(
            dimension_semantics=("parallel",),
            vmem_limit_bytes=vmem_limit),
        cost_estimate=cost,
    )(ctx_flat, latents, beta_bd,
      params["w1"], params["b1"],
      params["w2"], params["b2"],
      params["w3"], b3_fused)

    return out


def init_params(key, latent_dim, context_feat, hidden_dims, obs_dim):
    """Deterministic synthetic init (torch-style uniform +-1/sqrt(fan_in))."""
    dims = [latent_dim] + list(hidden_dims) + [obs_dim]
    ks = jax.random.split(key, 2 + 2 * (len(dims) - 1))
    p = {}
    bound = 1.0 / jnp.sqrt(context_feat)
    p["beta_w"] = jax.random.uniform(ks[0], (context_feat, 1), jnp.float32,
                                     -bound, bound)
    p["beta_b"] = jax.random.uniform(ks[1], (1,), jnp.float32, -bound, bound)
    for i, (din, dout) in enumerate(zip(dims[:-1], dims[1:])):
        b = 1.0 / jnp.sqrt(din)
        p[f"w{i+1}"] = jax.random.uniform(ks[2 + 2 * i], (din, dout),
                                          jnp.float32, -b, b)
        p[f"b{i+1}"] = jax.random.uniform(ks[3 + 2 * i], (1, dout),
                                          jnp.float32, -b, b)
    return p


def _reference(context, latents, params):
    B, A, F = context.shape
    determ = (context.reshape(B * A, F) @ params["beta_w"]
              + params["beta_b"]).reshape(B, A)
    h = latents @ params["w1"] + params["b1"]
    h = jnp.where(h > 0, h, 0.01 * h)
    h = h @ params["w2"] + params["b2"]
    h = jnp.where(h > 0, h, 0.01 * h)
    random = h @ params["w3"] + params["b3"]
    return determ + random


if __name__ == "__main__":
    # Shapes consistent with the module:
    #   A=8 alternatives (= obs_dim), F=4 context features,
    #   latent_dim=16, hidden_dims=[32, 32].
    A, F = 8, 4
    latent_dim, hidden_dims, obs_dim = 16, [32, 32], 8

    key = jax.random.PRNGKey(0)
    k_ctx, k_lat, k_par = jax.random.split(key, 3)
    params = init_params(k_par, latent_dim, F, hidden_dims, obs_dim)

    ok = True
    # (1) tiny batch (single block), (2) explicit small tile + ragged last
    # block, (3) default tile path with ragged last block.
    for B, block_b in [(2, 8192), (300, 128), (1000, 8192)]:
        kc, kl = jax.random.split(jax.random.fold_in(k_ctx, B))
        context = jax.random.normal(kc, (B, A, F), jnp.float32)
        latents = jax.random.normal(kl, (B, latent_dim), jnp.float32)

        util = decoder_forward(context, latents, params, block_b=block_b)
        util = jax.block_until_ready(util)

        ref = _reference(context, latents, params)
        assert util.shape == (B, A)
        ok &= bool(jnp.allclose(util, ref, atol=1e-5, rtol=1e-5))

    assert ok, "mismatch vs reference"
    print("KERNEL_OK")
</pallas_src>

<mosaic_0001>
module attributes {stable_mosaic.version = 11 : i64} {
  func.func @_decoder_kernel(%arg0: i32, %arg1: memref<2x32xf32, #tpu.memory_space<vmem>>, %arg2: memref<2x16xf32, #tpu.memory_space<vmem>>, %arg3: memref<32x8xf32, #tpu.memory_space<vmem>>, %arg4: memref<16x32xf32, #tpu.memory_space<vmem>>, %arg5: memref<1x32xf32, #tpu.memory_space<vmem>>, %arg6: memref<32x32xf32, #tpu.memory_space<vmem>>, %arg7: memref<1x32xf32, #tpu.memory_space<vmem>>, %arg8: memref<32x8xf32, #tpu.memory_space<vmem>>, %arg9: memref<1x8xf32, #tpu.memory_space<vmem>>, %arg10: memref<2x8xf32, #tpu.memory_space<vmem>>) attributes {dimension_semantics = [#tpu.dimension_semantics<parallel>], iteration_bounds = array<i64: 1>, scalar_prefetch = 0 : i64, scratch_operands = 0 : i64, tpu.core_type = #tpu.core_type<tc>, window_params = [{transform_indices = @transform_0, window_bounds = array<i64: 2, 32>}, {transform_indices = @transform_1, window_bounds = array<i64: 2, 16>}, {pipeline_mode = #tpu.pipeline_mode<synchronous>, transform_indices = @transform_2, window_bounds = array<i64: 32, 8>}, {pipeline_mode = #tpu.pipeline_mode<synchronous>, transform_indices = @transform_3, window_bounds = array<i64: 16, 32>}, {pipeline_mode = #tpu.pipeline_mode<synchronous>, transform_indices = @transform_4, window_bounds = array<i64: 1, 32>}, {pipeline_mode = #tpu.pipeline_mode<synchronous>, transform_indices = @transform_5, window_bounds = array<i64: 32, 32>}, {pipeline_mode = #tpu.pipeline_mode<synchronous>, transform_indices = @transform_6, window_bounds = array<i64: 1, 32>}, {pipeline_mode = #tpu.pipeline_mode<synchronous>, transform_indices = @transform_7, window_bounds = array<i64: 32, 8>}, {pipeline_mode = #tpu.pipeline_mode<synchronous>, transform_indices = @transform_8, window_bounds = array<i64: 1, 8>}, {transform_indices = @transform_9, window_bounds = array<i64: 2, 8>}]} {
    %c0 = arith.constant 0 : index
    %c0_0 = arith.constant 0 : index
    %0 = vector.load %arg1[%c0, %c0_0] : memref<2x32xf32, #tpu.memory_space<vmem>>, vector<2x32xf32>
    %c0_1 = arith.constant 0 : index
    %c0_2 = arith.constant 0 : index
    %1 = vector.load %arg3[%c0_1, %c0_2] : memref<32x8xf32, #tpu.memory_space<vmem>>, vector<32x8xf32>
    %cst = arith.constant dense<0.000000e+00> : vector<2x8xf32>
    %2 = tpu.matmul %0, %1, %cst {dimension_numbers = #tpu.dot_dimension_numbers<[1], [0], [0], [1], [0, 0, 1, 1], [], []>} : vector<2x32xf32>, vector<32x8xf32>, vector<2x8xf32> -> vector<2x8xf32>
    %c0_3 = arith.constant 0 : index
    %c0_4 = arith.constant 0 : index
    %3 = vector.load %arg2[%c0_3, %c0_4] : memref<2x16xf32, #tpu.memory_space<vmem>>, vector<2x16xf32>
    %c0_5 = arith.constant 0 : index
    %c0_6 = arith.constant 0 : index
    %4 = vector.load %arg4[%c0_5, %c0_6] : memref<16x32xf32, #tpu.memory_space<vmem>>, vector<16x32xf32>
    %cst_7 = arith.constant dense<0.000000e+00> : vector<2x32xf32>
    %5 = tpu.matmul %3, %4, %cst_7 {dimension_numbers = #tpu.dot_dimension_numbers<[1], [0], [0], [1], [0, 0, 1, 1], [], []>} : vector<2x16xf32>, vector<16x32xf32>, vector<2x32xf32> -> vector<2x32xf32>
    %c0_8 = arith.constant 0 : index
    %c0_9 = arith.constant 0 : index
    %6 = vector.load %arg5[%c0_8, %c0_9] : memref<1x32xf32, #tpu.memory_space<vmem>>, vector<1x32xf32>
    %7 = vector.broadcast %6 : vector<1x32xf32> to vector<2x32xf32>
    %8 = arith.addf %5, %7 : vector<2x32xf32>
    %cst_10 = arith.constant 0.00999999977 : f32
    %9 = vector.broadcast %cst_10 : f32 to vector<2x32xf32>
    %10 = arith.mulf %9, %8 : vector<2x32xf32>
    %11 = arith.maximumf %8, %10 : vector<2x32xf32>
    %c0_11 = arith.constant 0 : index
    %c0_12 = arith.constant 0 : index
    %12 = vector.load %arg6[%c0_11, %c0_12] : memref<32x32xf32, #tpu.memory_space<vmem>>, vector<32x32xf32>
    %cst_13 = arith.constant dense<0.000000e+00> : vector<2x32xf32>
    %13 = tpu.matmul %11, %12, %cst_13 {dimension_numbers = #tpu.dot_dimension_numbers<[1], [0], [0], [1], [0, 0, 1, 1], [], []>} : vector<2x32xf32>, vector<32x32xf32>, vector<2x32xf32> -> vector<2x32xf32>
    %c0_14 = arith.constant 0 : index
    %c0_15 = arith.constant 0 : index
    %14 = vector.load %arg7[%c0_14, %c0_15] : memref<1x32xf32, #tpu.memory_space<vmem>>, vector<1x32xf32>
    %15 = vector.broadcast %14 : vector<1x32xf32> to vector<2x32xf32>
    %16 = arith.addf %13, %15 : vector<2x32xf32>
    %cst_16 = arith.constant 0.00999999977 : f32
    %17 = vector.broadcast %cst_16 : f32 to vector<2x32xf32>
    %18 = arith.mulf %17, %16 : vector<2x32xf32>
    %19 = arith.maximumf %16, %18 : vector<2x32xf32>
    %c0_17 = arith.constant 0 : index
    %c0_18 = arith.constant 0 : index
    %20 = vector.load %arg8[%c0_17, %c0_18] : memref<32x8xf32, #tpu.memory_space<vmem>>, vector<32x8xf32>
    %cst_19 = arith.constant dense<0.000000e+00> : vector<2x8xf32>
    %21 = tpu.matmul %19, %20, %cst_19 {dimension_numbers = #tpu.dot_dimension_numbers<[1], [0], [0], [1], [0, 0, 1, 1], [], []>} : vector<2x32xf32>, vector<32x8xf32>, vector<2x8xf32> -> vector<2x8xf32>
    %c0_20 = arith.constant 0 : index
    %c0_21 = arith.constant 0 : index
    %22 = vector.load %arg9[%c0_20, %c0_21] : memref<1x8xf32, #tpu.memory_space<vmem>>, vector<1x8xf32>
    %23 = vector.broadcast %22 : vector<1x8xf32> to vector<2x8xf32>
    %24 = arith.addf %21, %23 : vector<2x8xf32>
    %25 = arith.addf %2, %24 : vector<2x8xf32>
    %c0_22 = arith.constant 0 : index
    %c0_23 = arith.constant 0 : index
    %26 = vector.load %arg10[%c0_22, %c0_23] : memref<2x8xf32, #tpu.memory_space<vmem>>, vector<2x8xf32>
    tpu.vector_store %arg10[%c0_22, %c0_23], %25 {strides = array<i32>} : memref<2x8xf32, #tpu.memory_space<vmem>>, vector<2x8xf32>,
    return
  }
  func.func @transform_0(%arg0: i32) -> (i32, i32) {
    %c0_i32 = arith.constant 0 : i32
    %c0_i32_0 = arith.constant 0 : i32
    return %arg0, %c0_i32 : i32, i32
  }
  func.func @transform_1(%arg0: i32) -> (i32, i32) {
    %c0_i32 = arith.constant 0 : i32
    %c0_i32_0 = arith.constant 0 : i32
    return %arg0, %c0_i32 : i32, i32
  }
  func.func @transform_2(%arg0: i32) -> (i32, i32) {
    %c0_i32 = arith.constant 0 : i32
    %c0_i32_0 = arith.constant 0 : i32
    %c0_i32_1 = arith.constant 0 : i32
    return %c0_i32, %c0_i32_0 : i32, i32
  }
  func.func @transform_3(%arg0: i32) -> (i32, i32) {
    %c0_i32 = arith.constant 0 : i32
    %c0_i32_0 = arith.constant 0 : i32
    %c0_i32_1 = arith.constant 0 : i32
    return %c0_i32, %c0_i32_0 : i32, i32
  }
  func.func @transform_4(%arg0: i32) -> (i32, i32) {
    %c0_i32 = arith.constant 0 : i32
    %c0_i32_0 = arith.constant 0 : i32
    %c0_i32_1 = arith.constant 0 : i32
    return %c0_i32, %c0_i32_0 : i32, i32
  }
  func.func @transform_5(%arg0: i32) -> (i32, i32) {
    %c0_i32 = arith.constant 0 : i32
    %c0_i32_0 = arith.constant 0 : i32
    %c0_i32_1 = arith.constant 0 : i32
    return %c0_i32, %c0_i32_0 : i32, i32
  }
  func.func @transform_6(%arg0: i32) -> (i32, i32) {
    %c0_i32 = arith.constant 0 : i32
    %c0_i32_0 = arith.constant 0 : i32
    %c0_i32_1 = arith.constant 0 : i32
    return %c0_i32, %c0_i32_0 : i32, i32
  }
  func.func @transform_7(%arg0: i32) -> (i32, i32) {
    %c0_i32 = arith.constant 0 : i32
    %c0_i32_0 = arith.constant 0 : i32
    %c0_i32_1 = arith.constant 0 : i32
    return %c0_i32, %c0_i32_0 : i32, i32
  }
  func.func @transform_8(%arg0: i32) -> (i32, i32) {
    %c0_i32 = arith.constant 0 : i32
    %c0_i32_0 = arith.constant 0 : i32
    %c0_i32_1 = arith.constant 0 : i32
    return %c0_i32, %c0_i32_0 : i32, i32
  }
  func.func @transform_9(%arg0: i32) -> (i32, i32) {
    %c0_i32 = arith.constant 0 : i32
    %c0_i32_0 = arith.constant 0 : i32
    return %arg0, %c0_i32 : i32, i32
  }
}

</mosaic_0001>

<llo_original>
// kernel: tpu_custom_call.1
$region0: #{tpu_custom_call.1}
  #allocation0 [shape = 'u32[]', space=smem, size = 0x4, offset = 0x4, fixed_abs, tag = 'smem constant byte address 0x4 - core index']
  #allocation1 [shape = 'u32[144,128]{1,0:T(1,128)}', space=vmem, size = 0x12000, scoped, tag = 'internal scratch']
  %s0 = inlined_call_operand.vmem [shape: f32[2,32], index: 0, kind: input, shape index: {}]
  %s1 = inlined_call_operand.vmem [shape: f32[2,16], index: 1, kind: input, shape index: {}]
  %s2 = inlined_call_operand.vmem [shape: f32[32,8], index: 2, kind: input, shape index: {}]
  %s3 = inlined_call_operand.vmem [shape: f32[16,32], index: 3, kind: input, shape index: {}]
  %s4 = inlined_call_operand.vmem [shape: f32[1,32], index: 4, kind: input, shape index: {}]
  %s5 = inlined_call_operand.vmem [shape: f32[32,32], index: 5, kind: input, shape index: {}]
  %s6 = inlined_call_operand.vmem [shape: f32[1,32], index: 6, kind: input, shape index: {}]
  %s7 = inlined_call_operand.vmem [shape: f32[32,8], index: 7, kind: input, shape index: {}]
  %s8 = inlined_call_operand.vmem [shape: f32[1,8], index: 8, kind: input, shape index: {}]
  %s9 = inlined_call_operand.hbm [shape: f32[2,8], index: 9, kind: output, shape index: {}]
  %s10 = sld [smem:[#allocation0]]
  $region46: #{tpu_custom_call.1} parent=0
    _
  %s12 = ssub.s32 1, %s10
  %s13 = scalar_select 0, %s12, %s10
  $region1: #{tpu_custom_call.1} parent=0
    #allocation2 [shape = 'u8[1024]{0}', space=vmem, size = 0x400, scoped, tag = 'output window, operand 0, single buffered']
    #allocation3 [shape = 's32[1]{0}', space=sflag, size = 0x4, scoped, tag = 'scoped memory for tpu_custom_call.1']
    %14 = vsyncpa [#allocation3], 0
    // Predicated region
    $region2: #{tpu_custom_call.1} parent=1 // pred_check
      _
    $region3: #{tpu_custom_call.1} parent=1 // pred_check_branch
      %16 = sbr.rel (0) target = $region5
    $region4: #{tpu_custom_call.1} parent=1 // pred_region
      _
    $region5: #{tpu_custom_call.1} parent=1 // pred_fallthru
      _
    // Predicated region
    $region6: #{tpu_custom_call.1} parent=1 // pred_check
      _
    $region7: #{tpu_custom_call.1} parent=1 // pred_check_branch
      %18 = sbr.rel (0) target = $region9
    $region8: #{tpu_custom_call.1} parent=1 // pred_region
      _
    $region9: #{tpu_custom_call.1} parent=1 // pred_fallthru
      _
    // Predicated region
    $region10: #{tpu_custom_call.1} parent=1 // pred_check
      _
    $region11: #{tpu_custom_call.1} parent=1 // pred_check_branch
      %20 = sbr.rel (0) target = $region13
    $region12: #{tpu_custom_call.1} parent=1 // pred_region
      _
    $region13: #{tpu_custom_call.1} parent=1 // pred_fallthru
      _
    // Predicated region
    $region14: #{tpu_custom_call.1} parent=1 // pred_check
      _
    $region15: #{tpu_custom_call.1} parent=1 // pred_check_branch
      %22 = sbr.rel (0) target = $region17
    $region16: #{tpu_custom_call.1} parent=1 // pred_region
      _
    $region17: #{tpu_custom_call.1} parent=1 // pred_fallthru
      _
    // Predicated region
    $region18: #{tpu_custom_call.1} parent=1 // pred_check
      _
    $region19: #{tpu_custom_call.1} parent=1 // pred_check_branch
      %24 = sbr.rel (0) target = $region21
    $region20: #{tpu_custom_call.1} parent=1 // pred_region
      _
    $region21: #{tpu_custom_call.1} parent=1 // pred_fallthru
      _
    // Predicated region
    $region22: #{tpu_custom_call.1} parent=1 // pred_check
      _
    $region23: #{tpu_custom_call.1} parent=1 // pred_check_branch
      %26 = sbr.rel (0) target = $region25
    $region24: #{tpu_custom_call.1} parent=1 // pred_region
      _
    $region25: #{tpu_custom_call.1} parent=1 // pred_fallthru
      _
    // Predicated region
    $region26: #{tpu_custom_call.1} parent=1 // pred_check
      _
    $region27: #{tpu_custom_call.1} parent=1 // pred_check_branch
      %28 = sbr.rel (0) target = $region29
    $region28: #{tpu_custom_call.1} parent=1 // pred_region
      _
    $region29: #{tpu_custom_call.1} parent=1 // pred_fallthru
      _
    // Predicated region
    $region30: #{tpu_custom_call.1} parent=1 // pred_check
      _
    $region31: #{tpu_custom_call.1} parent=1 // pred_check_branch
      %30 = sbr.rel (0) target = $region33
    $region32: #{tpu_custom_call.1} parent=1 // pred_region
      _
    $region33: #{tpu_custom_call.1} parent=1 // pred_fallthru
      _
    // Predicated region
    $region34: #{tpu_custom_call.1} parent=1 // pred_check
      _
    $region35: #{tpu_custom_call.1} parent=1 // pred_check_branch
      %32 = sbr.rel (0) target = $region37
    $region36: #{tpu_custom_call.1} parent=1 // pred_region
      _
    $region37: #{tpu_custom_call.1} parent=1 // pred_fallthru
      _
    %v33 = vld [vmem:[%s0] sm:$0x3]
    %v34 = vld [vmem:[%s2] sm:$0xff]
    %v35 = vld [vmem:[%s2 + $0x8] sm:$0xff]
    %v36 = vld [vmem:[%s2 + $0x10] sm:$0xff]
    %v37 = vld [vmem:[%s2 + $0x18] sm:$0xff]
    %v38 = vld [vmem:[%s1] sm:$0x3]
    %v39 = vld [vmem:[%s3] sm:$0xff]
    %v40 = vld [vmem:[%s3 + $0x8] sm:$0xff]
    %v41 = vld [vmem:[%s4] sm:$0x1]
    %v43 = vlaneseq
    %v44 = vshrl.u32 %v43, 7
    %v45 = vsub.s32 0, %v44
    %v46 = vrot.slane %v41, %v45
    %vm48 = vcmask 130048
    %v50 = vsel %vm48, %v38, 0
    %52 = vmatprep.subr.mxu0 0.0
    %53 = vmatpush1.msra.mxu0 %v39
    %54 = vmatprep.subr.mxu0 0.0
    %55 = vmatpush1.msra.mxu0 %v40
    %56 = vmatprep.subr.mxu0 0.0
    %57 = vmatpush1.msra.mxu0 0.0
    %58 = vmatprep.subr.mxu0 0.0
    %59 = vmatpush1.msra.mxu0 0.0
    %60 = vmatprep.subr.mxu0 0.0
    %61 = vmatpush1.msra.mxu0 0.0
    %62 = vmatprep.subr.mxu0 0.0
    %63 = vmatpush1.msra.mxu0 0.0
    %64 = vmatprep.subr.mxu0 0.0
    %65 = vmatpush1.msra.mxu0 0.0
    %66 = vmatprep.subr.mxu0 0.0
    %67 = vmatpush1.msra.mxu0 0.0
    %68 = vmatprep.subr.mxu0 0.0
    %69 = vmatpush1.msra.mxu0 0.0
    %70 = vmatprep.subr.mxu0 0.0
    %71 = vmatpush1.msra.mxu0 0.0
    %72 = vmatprep.subr.mxu0 0.0
    %73 = vmatpush1.msra.mxu0 0.0
    %74 = vmatprep.subr.mxu0 0.0
    %75 = vmatpush1.msra.mxu0 0.0
    %76 = vmatprep.subr.mxu0 0.0
    %77 = vmatpush1.msra.mxu0 0.0
    %78 = vmatprep.subr.mxu0 0.0
    %79 = vmatpush1.msra.mxu0 0.0
    %80 = vmatprep.subr.mxu0 0.0
    %81 = vmatpush1.msra.mxu0 0.0
    %82 = vmatprep.subr.mxu0 0.0
    %83 = vmatpush1.msra.mxu0 0.0
    %84 = vmatprep.subr.mxu0 0.0
    %85 = vmatpush1.msra.mxu0 0.0
    %86 = vmatprep.subr.mxu0 0.0
    %87 = vmatpush1.msra.mxu0 0.0
    %88 = vmatprep.subr.mxu0 0.0
    %89 = vmatpush1.msra.mxu0 0.0
    %90 = vmatprep.subr.mxu0 0.0
    %91 = vmatpush1.msra.mxu0 0.0
    %92 = vmatprep.subr.mxu0 0.0
    %93 = vmatpush1.msra.mxu0 0.0
    %94 = vmatprep.subr.mxu0 0.0
    %95 = vmatpush1.msra.mxu0 0.0
    %96 = vmatprep.subr.mxu0 0.0
    %97 = vmatpush1.msra.mxu0 0.0
    %98 = vmatprep.subr.mxu0 0.0
    %99 = vmatpush1.msra.mxu0 0.0
    %100 = vmatprep.subr.mxu0 0.0
    %101 = vmatpush1.msra.mxu0 0.0
    %102 = vmatprep.subr.mxu0 0.0
    %103 = vmatpush1.msra.mxu0 0.0
    %104 = vmatprep.subr.mxu0 0.0
    %105 = vmatpush1.msra.mxu0 0.0
    %106 = vmatprep.subr.mxu0 0.0
    %107 = vmatpush1.msra.mxu0 0.0
    %108 = vmatprep.subr.mxu0 0.0
    %109 = vmatpush1.msra.mxu0 0.0
    %110 = vmatprep.subr.mxu0 0.0
    %111 = vmatpush1.msra.mxu0 0.0
    %112 = vmatprep.subr.mxu0 0.0
    %113 = vmatpush1.msra.mxu0 0.0
    %114 = vmatprep.subr.mxu0 0.0
    %115 = vmatpush1.msra.mxu0 0.0
    %116 = vmatprep.mubr.f32.mxu0 0.0
    %117 = vmatmul.mubr.f32.gmra.mrb[0].mxu0 %v50
    %v118 = vpop.f32.mrb[0].mxu0
    %v119 = vadd.f32 %v46, %v118
    %v120 = vpop.f32.mrb[0].mxu0
    %121 = vdwg.mxu0
    %v122 = vmul.f32 %v119, 0.01
    %v123 = vmax.f32 %v119, %v122
    %v124 = vld [vmem:[%s5] sm:$0xff]
    %v125 = vld [vmem:[%s5 + $0x8] sm:$0xff]
    %v126 = vld [vmem:[%s5 + $0x10] sm:$0xff]
    %v127 = vld [vmem:[%s5 + $0x18] sm:$0xff]
    %v128 = vld [vmem:[%s6] sm:$0x1]
    %v130 = vlaneseq
    %v131 = vshrl.u32 %v130, 7
    %v132 = vsub.s32 0, %v131
    %v133 = vrot.slane %v128, %v132
    %vm135 = vcmask 261120
    %v137 = vsel %vm135, %v123, 0
    %139 = vmatprep.subr.mxu0 0.0
    %140 = vmatpush1.msra.mxu0 %v124
    %141 = vmatprep.subr.mxu0 0.0
    %142 = vmatpush1.msra.mxu0 %v125
    %143 = vmatprep.subr.mxu0 0.0
    %144 = vmatpush1.msra.mxu0 %v126
    %145 = vmatprep.subr.mxu0 0.0
    %146 = vmatpush1.msra.mxu0 %v127
    %147 = vmatprep.subr.mxu0 0.0
    %148 = vmatpush1.msra.mxu0 0.0
    %149 = vmatprep.subr.mxu0 0.0
    %150 = vmatpush1.msra.mxu0 0.0
    %151 = vmatprep.subr.mxu0 0.0
    %152 = vmatpush1.msra.mxu0 0.0
    %153 = vmatprep.subr.mxu0 0.0
    %154 = vmatpush1.msra.mxu0 0.0
    %155 = vmatprep.subr.mxu0 0.0
    %156 = vmatpush1.msra.mxu0 0.0
    %157 = vmatprep.subr.mxu0 0.0
    %158 = vmatpush1.msra.mxu0 0.0
    %159 = vmatprep.subr.mxu0 0.0
    %160 = vmatpush1.msra.mxu0 0.0
    %161 = vmatprep.subr.mxu0 0.0
    %162 = vmatpush1.msra.mxu0 0.0
    %163 = vmatprep.subr.mxu0 0.0
    %164 = vmatpush1.msra.mxu0 0.0
    %165 = vmatprep.subr.mxu0 0.0
    %166 = vmatpush1.msra.mxu0 0.0
    %167 = vmatprep.subr.mxu0 0.0
    %168 = vmatpush1.msra.mxu0 0.0
    %169 = vmatprep.subr.mxu0 0.0
    %170 = vmatpush1.msra.mxu0 0.0
    %171 = vmatprep.subr.mxu0 0.0
    %172 = vmatpush1.msra.mxu0 0.0
    %173 = vmatprep.subr.mxu0 0.0
    %174 = vmatpush1.msra.mxu0 0.0
    %175 = vmatprep.subr.mxu0 0.0
    %176 = vmatpush1.msra.mxu0 0.0
    %177 = vmatprep.subr.mxu0 0.0
    %178 = vmatpush1.msra.mxu0 0.0
    %179 = vmatprep.subr.mxu0 0.0
    %180 = vmatpush1.msra.mxu0 0.0
    %181 = vmatprep.subr.mxu0 0.0
    %182 = vmatpush1.msra.mxu0 0.0
    %183 = vmatprep.subr.mxu0 0.0
    %184 = vmatpush1.msra.mxu0 0.0
    %185 = vmatprep.subr.mxu0 0.0
    %186 = vmatpush1.msra.mxu0 0.0
    %187 = vmatprep.subr.mxu0 0.0
    %188 = vmatpush1.msra.mxu0 0.0
    %189 = vmatprep.subr.mxu0 0.0
    %190 = vmatpush1.msra.mxu0 0.0
    %191 = vmatprep.subr.mxu0 0.0
    %192 = vmatpush1.msra.mxu0 0.0
    %193 = vmatprep.subr.mxu0 0.0
    %194 = vmatpush1.msra.mxu0 0.0
    %195 = vmatprep.subr.mxu0 0.0
    %196 = vmatpush1.msra.mxu0 0.0
    %197 = vmatprep.subr.mxu0 0.0
    %198 = vmatpush1.msra.mxu0 0.0
    %199 = vmatprep.subr.mxu0 0.0
    %200 = vmatpush1.msra.mxu0 0.0
    %201 = vmatprep.subr.mxu0 0.0
    %202 = vmatpush1.msra.mxu0 0.0
    %203 = vmatprep.mubr.f32.mxu0 0.0
    %204 = vmatmul.mubr.f32.gmra.mrb[0].mxu0 %v137
    %v205 = vpop.f32.mrb[0].mxu0
    %v206 = vadd.f32 %v133, %v205
    %v207 = vpop.f32.mrb[0].mxu0
    %208 = vdwg.mxu0
    %v209 = vmul.f32 %v206, 0.01
    %v210 = vmax.f32 %v206, %v209
    %v211 = vld [vmem:[%s7] sm:$0xff]
    %v212 = vld [vmem:[%s7 + $0x8] sm:$0xff]
    %v213 = vld [vmem:[%s7 + $0x10] sm:$0xff]
    %v214 = vld [vmem:[%s7 + $0x18] sm:$0xff]
    %v215 = vld [vmem:[%s8] sm:$0x1]
    %v217 = vlaneseq
    %v218 = vshrl.u32 %v217, 7
    %v219 = vsub.s32 0, %v218
    %v220 = vrot.slane %v215, %v219
    %v223 = vsel %vm135, %v210, 0
    %225 = vmatprep.subr.mxu0 0.0
    %226 = vmatpush1.msra.mxu0 %v211
    %227 = vmatprep.subr.mxu0 0.0
    %228 = vmatpush1.msra.mxu0 %v212
    %229 = vmatprep.subr.mxu0 0.0
    %230 = vmatpush1.msra.mxu0 %v213
    %231 = vmatprep.subr.mxu0 0.0
    %232 = vmatpush1.msra.mxu0 %v214
    %233 = vmatprep.subr.mxu0 0.0
    %234 = vmatpush1.msra.mxu0 0.0
    %235 = vmatprep.subr.mxu0 0.0
    %236 = vmatpush1.msra.mxu0 0.0
    %237 = vmatprep.subr.mxu0 0.0
    %238 = vmatpush1.msra.mxu0 0.0
    %239 = vmatprep.subr.mxu0 0.0
    %240 = vmatpush1.msra.mxu0 0.0
    %241 = vmatprep.subr.mxu0 0.0
    %242 = vmatpush1.msra.mxu0 0.0
    %243 = vmatprep.subr.mxu0 0.0
    %244 = vmatpush1.msra.mxu0 0.0
    %245 = vmatprep.subr.mxu0 0.0
    %246 = vmatpush1.msra.mxu0 0.0
    %247 = vmatprep.subr.mxu0 0.0
    %248 = vmatpush1.msra.mxu0 0.0
    %249 = vmatprep.subr.mxu0 0.0
    %250 = vmatpush1.msra.mxu0 0.0
    %251 = vmatprep.subr.mxu0 0.0
    %252 = vmatpush1.msra.mxu0 0.0
    %253 = vmatprep.subr.mxu0 0.0
    %254 = vmatpush1.msra.mxu0 0.0
    %255 = vmatprep.subr.mxu0 0.0
    %256 = vmatpush1.msra.mxu0 0.0
    %257 = vmatprep.subr.mxu0 0.0
    %258 = vmatpush1.msra.mxu0 0.0
    %259 = vmatprep.subr.mxu0 0.0
    %260 = vmatpush1.msra.mxu0 0.0
    %261 = vmatprep.subr.mxu0 0.0
    %262 = vmatpush1.msra.mxu0 0.0
    %263 = vmatprep.subr.mxu0 0.0
    %264 = vmatpush1.msra.mxu0 0.0
    %265 = vmatprep.subr.mxu0 0.0
    %266 = vmatpush1.msra.mxu0 0.0
    %267 = vmatprep.subr.mxu0 0.0
    %268 = vmatpush1.msra.mxu0 0.0
    %269 = vmatprep.subr.mxu0 0.0
    %270 = vmatpush1.msra.mxu0 0.0
    %271 = vmatprep.subr.mxu0 0.0
    %272 = vmatpush1.msra.mxu0 0.0
    %273 = vmatprep.subr.mxu0 0.0
    %274 = vmatpush1.msra.mxu0 0.0
    %275 = vmatprep.subr.mxu0 0.0
    %276 = vmatpush1.msra.mxu0 0.0
    %277 = vmatprep.subr.mxu0 0.0
    %278 = vmatpush1.msra.mxu0 0.0
    %279 = vmatprep.subr.mxu0 0.0
    %280 = vmatpush1.msra.mxu0 0.0
    %281 = vmatprep.subr.mxu0 0.0
    %282 = vmatpush1.msra.mxu0 0.0
    %283 = vmatprep.subr.mxu0 0.0
    %284 = vmatpush1.msra.mxu0 0.0
    %285 = vmatprep.subr.mxu0 0.0
    %286 = vmatpush1.msra.mxu0 0.0
    %287 = vmatprep.subr.mxu0 0.0
    %288 = vmatpush1.msra.mxu0 0.0
    %289 = vmatprep.mubr.f32.mxu0 0.0
    %290 = vmatmul.mubr.f32.gmra.mrb[0].mxu0 %v223
    %v291 = vpop.f32.mrb[0].mxu0
    %v292 = vadd.f32 %v220, %v291
    %v293 = vpop.f32.mrb[0].mxu0
    %294 = vdwg.mxu0
    %v296 = vsel %vm135, %v33, 0
    %298 = vmatprep.subr.mxu0 0.0
    %299 = vmatpush1.msra.mxu0 %v34
    %300 = vmatprep.subr.mxu0 0.0
    %301 = vmatpush1.msra.mxu0 %v35
    %302 = vmatprep.subr.mxu0 0.0
    %303 = vmatpush1.msra.mxu0 %v36
    %304 = vmatprep.subr.mxu0 0.0
    %305 = vmatpush1.msra.mxu0 %v37
    %306 = vmatprep.subr.mxu0 0.0
    %307 = vmatpush1.msra.mxu0 0.0
    %308 = vmatprep.subr.mxu0 0.0
    %309 = vmatpush1.msra.mxu0 0.0
    %310 = vmatprep.subr.mxu0 0.0
    %311 = vmatpush1.msra.mxu0 0.0
    %312 = vmatprep.subr.mxu0 0.0
    %313 = vmatpush1.msra.mxu0 0.0
    %314 = vmatprep.subr.mxu0 0.0
    %315 = vmatpush1.msra.mxu0 0.0
    %316 = vmatprep.subr.mxu0 0.0
    %317 = vmatpush1.msra.mxu0 0.0
    %318 = vmatprep.subr.mxu0 0.0
    %319 = vmatpush1.msra.mxu0 0.0
    %320 = vmatprep.subr.mxu0 0.0
    %321 = vmatpush1.msra.mxu0 0.0
    %322 = vmatprep.subr.mxu0 0.0
    %323 = vmatpush1.msra.mxu0 0.0
    %324 = vmatprep.subr.mxu0 0.0
    %325 = vmatpush1.msra.mxu0 0.0
    %326 = vmatprep.subr.mxu0 0.0
    %327 = vmatpush1.msra.mxu0 0.0
    %328 = vmatprep.subr.mxu0 0.0
    %329 = vmatpush1.msra.mxu0 0.0
    %330 = vmatprep.subr.mxu0 0.0
    %331 = vmatpush1.msra.mxu0 0.0
    %332 = vmatprep.subr.mxu0 0.0
    %333 = vmatpush1.msra.mxu0 0.0
    %334 = vmatprep.subr.mxu0 0.0
    %335 = vmatpush1.msra.mxu0 0.0
    %336 = vmatprep.subr.mxu0 0.0
    %337 = vmatpush1.msra.mxu0 0.0
    %338 = vmatprep.subr.mxu0 0.0
    %339 = vmatpush1.msra.mxu0 0.0
    %340 = vmatprep.subr.mxu0 0.0
    %341 = vmatpush1.msra.mxu0 0.0
    %342 = vmatprep.subr.mxu0 0.0
    %343 = vmatpush1.msra.mxu0 0.0
    %344 = vmatprep.subr.mxu0 0.0
    %345 = vmatpush1.msra.mxu0 0.0
    %346 = vmatprep.subr.mxu0 0.0
    %347 = vmatpush1.msra.mxu0 0.0
    %348 = vmatprep.subr.mxu0 0.0
    %349 = vmatpush1.msra.mxu0 0.0
    %350 = vmatprep.subr.mxu0 0.0
    %351 = vmatpush1.msra.mxu0 0.0
    %352 = vmatprep.subr.mxu0 0.0
    %353 = vmatpush1.msra.mxu0 0.0
    %354 = vmatprep.subr.mxu0 0.0
    %355 = vmatpush1.msra.mxu0 0.0
    %356 = vmatprep.subr.mxu0 0.0
    %357 = vmatpush1.msra.mxu0 0.0
    %358 = vmatprep.subr.mxu0 0.0
    %359 = vmatpush1.msra.mxu0 0.0
    %360 = vmatprep.subr.mxu0 0.0
    %361 = vmatpush1.msra.mxu0 0.0
    %362 = vmatprep.mubr.f32.mxu0 0.0
    %363 = vmatmul.mubr.f32.gmra.mrb[0].mxu0 %v296
    %v364 = vpop.f32.mrb[0].mxu0
    %v365 = vadd.f32 %v292, %v364
    %v366 = vpop.f32.mrb[0].mxu0
    %367 = vdwg.mxu0
    %vm368 = vcmask 58368
    %369 = vst.msk [vmem:[#allocation2] sm:$0x3] %vm368, %v365
    // Predicated region
    $region38: #{tpu_custom_call.1} parent=1 // pred_check
      _
    $region39: #{tpu_custom_call.1} parent=1 // pred_check_branch
      %371 = sbr.rel (0) target = $region41
    $region40: #{tpu_custom_call.1} parent=1 // pred_region
      %s373 = ssub.s32 32, 32
      %374 = vsyncadd [#allocation3], %s373
      %s376 = sshll.u32 [#allocation2], 4
      %s377 = int_to_ptr.vmem [resolvable:$true] %s376
      %379 = dma.vmem_to_hbm [thread:$0]  %s377, 32, %s9, [#allocation3]
    $region41: #{tpu_custom_call.1} parent=1 // pred_fallthru
      _
    // Predicated region
    $region42: #{tpu_custom_call.1} parent=1 // pred_check
      _
    $region43: #{tpu_custom_call.1} parent=1 // pred_check_branch
      %381 = sbr.rel (0) target = $region45
    $region44: #{tpu_custom_call.1} parent=1 // pred_region
      %382 = dma.done [#allocation3], 32
    $region45: #{tpu_custom_call.1} parent=1 // pred_fallthru
      _
    %383 = vsyncpa [#allocation3], 1

</llo_original>
